<compile_context>
chip_gen: v7x
topology: tpu7x:2x2x1
jax: 0.10.0
libtpu: 0.0.40
codegen_flags: <defaults>
</compile_context>

<pallas_src>
import math
import numpy as np

import jax
import jax.numpy as jnp
from jax.experimental import pallas as pl
from jax.experimental.pallas import tpu as pltpu


def _gaussian_1d(window_size: int, sigma: float) -> np.ndarray:
    """Matches torch's gaussian(): f32 exp taps, f32 normalize."""
    g = np.array(
        [math.exp(-((x - window_size // 2) ** 2) / (2.0 * sigma ** 2))
         for x in range(window_size)],
        dtype=np.float32,
    )
    return (g / g.sum(dtype=np.float32)).astype(np.float32)


def _conv_matrix(n_in: int, K: int, pad: int, g: np.ndarray) -> np.ndarray:
    """Banded matrix M (n_out, n_in): (M @ x) == 1-D conv of x with taps g, zero padding."""
    n_out = n_in + 2 * pad - K + 1
    M = np.zeros((n_out, n_in), dtype=np.float32)
    for i in range(n_out):
        for r in range(n_in):
            k = r - i + pad
            if 0 <= k < K:
                M[i, r] = g[k]
    return M


def _make_ssim_kernel(H: int, W: int, Hout: int, Wout: int, B: int, fuse_h: bool):
    C1 = 0.01 ** 2
    C2 = 0.03 ** 2

    def kernel(gh_ref, gw_ref, p_ref, l_ref, out_ref):
        # p/l block: (H, B*W)  -- B planes side by side along the lane axis.
        p = p_ref[...]
        l = l_ref[...]

        # Five conv operands stacked along sublanes: (5*H, B*W).
        x5 = jnp.concatenate([p, l, p * p, l * l, p * l], axis=0)

        # W-direction Gaussian filtering: one MXU matmul.
        # gw_ref = kron(I_B, G_w^T): (B*W, B*Wout), block-diagonal -> planes stay independent.
        y = jnp.dot(x5, gw_ref[...], preferred_element_type=jnp.float32)   # (5H, B*Wout)

        # H-direction Gaussian filtering.
        if fuse_h:
            # gh_ref = kron(I_5, G_h): (5*Hout, 5*H) -> single MXU matmul.
            z = jnp.dot(gh_ref[...], y, preferred_element_type=jnp.float32)  # (5Hout, B*Wout)
            parts = [z[k * Hout:(k + 1) * Hout] for k in range(5)]
        else:
            # Large H: avoid the kron blow-up, 5 small matmuls with plain G_h (Hout, H).
            gh = gh_ref[...]
            parts = [
                jnp.dot(gh, y[k * H:(k + 1) * H], preferred_element_type=jnp.float32)
                for k in range(5)
            ]

        mu1, mu2, e11, e22, e12 = parts
        mu1_sq = mu1 * mu1
        mu2_sq = mu2 * mu2
        mu1_mu2 = mu1 * mu2
        sigma1_sq = e11 - mu1_sq
        sigma2_sq = e22 - mu2_sq
        sigma12 = e12 - mu1_mu2

        num = (2.0 * mu1_mu2 + C1) * (2.0 * sigma12 + C2)
        den = (mu1_sq + mu2_sq + C1) * (sigma1_sq + sigma2_sq + C2)
        ssim_map = num / den                                   # (Hout, B*Wout)

        # Lane-dense per-step partial sums; final reduction happens in JAX.
        partial = jnp.sum(ssim_map, axis=0, keepdims=True)     # (1, B*Wout)
        row = jax.lax.broadcasted_iota(jnp.int32, (8, B * Wout), 0)
        out_ref[...] = jnp.where(row == 0,
                                 jnp.broadcast_to(partial, (8, B * Wout)),
                                 0.0)

    return kernel


def ssim_loss(pred, label, window_size: int = 11, size_average: bool = True):
    """JAX/Pallas equivalent of SSIMLoss().forward(pred, label)."""
    if pred.ndim == 3:
        pred = pred[:, None]
    if label.ndim == 3:
        label = label[:, None]
    if not size_average:
        # TODO(synk): per-batch mean (size_average=False) path not implemented.
        raise NotImplementedError("size_average=False not implemented")

    N, C, H, W = pred.shape
    K = window_size
    pad = K // 2
    Hout = H + 2 * pad - K + 1
    Wout = W + 2 * pad - K + 1
    NC = N * C

    g = _gaussian_1d(K, 1.5)
    Gh = _conv_matrix(H, K, pad, g)        # (Hout, H)
    GwT = _conv_matrix(W, K, pad, g).T     # (W, Wout)

    # --- choose how many planes per grid step (packed along lanes) ---------------
    LANE_CAP = 1024  # bounds kron(I_B, GwT) to <= 4 MiB f32 and keeps blocks VMEM-friendly
    if NC * W <= LANE_CAP:
        B = NC
    else:
        B = max(1, LANE_CAP // W)
        while B > 1 and (B * W) % 128 != 0:
            B -= 1
        if (B * W) % 128 != 0:
            # TODO(synk): W not tileable into 128-lane plane blocks; fall back to one block
            # (may be VMEM-heavy for very large images; strip-tiling H not implemented).
            B = NC
    G = -(-NC // B)                # ceil div
    pad_planes = G * B - NC
    NCp = NC + pad_planes

    # Structural (banded / block-diagonal) conv matrices, built once on host.
    GwB = np.kron(np.eye(B, dtype=np.float32), GwT)          # (B*W, B*Wout)
    fuse_h = (5 * Hout) * (5 * H) * 4 <= (4 << 20)
    gh_mat = np.kron(np.eye(5, dtype=np.float32), Gh) if fuse_h else Gh

    # Layout plumbing: planes packed side-by-side along the last (lane) axis.
    p = pred.reshape(NC, H, W).astype(jnp.float32)
    l = label.reshape(NC, H, W).astype(jnp.float32)
    if pad_planes:
        p = jnp.pad(p, ((0, pad_planes), (0, 0), (0, 0)))
        l = jnp.pad(l, ((0, pad_planes), (0, 0), (0, 0)))
    p2 = jnp.transpose(p, (1, 0, 2)).reshape(H, NCp * W)      # (H, NCp*W)
    l2 = jnp.transpose(l, (1, 0, 2)).reshape(H, NCp * W)

    kernel = _make_ssim_kernel(H, W, Hout, Wout, B, fuse_h)

    partials = pl.pallas_call(
        kernel,
        out_shape=jax.ShapeDtypeStruct((G * 8, B * Wout), jnp.float32),
        grid=(G,),
        in_specs=[
            pl.BlockSpec(gh_mat.shape, lambda i: (0, 0)),     # H-side conv matrix (constant)
            pl.BlockSpec(GwB.shape, lambda i: (0, 0)),        # W-side conv matrix (constant)
            pl.BlockSpec((H, B * W), lambda i: (0, i)),       # B pred planes
            pl.BlockSpec((H, B * W), lambda i: (0, i)),       # B label planes
        ],
        out_specs=pl.BlockSpec((8, B * Wout), lambda i: (i, 0)),
        compiler_params=pltpu.CompilerParams(
            dimension_semantics=("parallel",),
            vmem_limit_bytes=32 * 1024 * 1024,
        ),
    )(jnp.asarray(gh_mat), jnp.asarray(GwB), p2, l2)

    total = jnp.sum(partials)
    # Zero-padded planes produce an exact all-ones SSIM map; remove their contribution.
    if pad_planes:
        total = total - float(pad_planes * Hout * Wout)
    mean_ssim = total / float(NC * Hout * Wout)
    return 1.0 - mean_ssim


if __name__ == "__main__":
    key = jax.random.PRNGKey(0)
    k1, k2 = jax.random.split(key)
    pred = jax.random.uniform(k1, (2, 4, 16, 16), dtype=jnp.float32)
    label = jax.random.uniform(k2, (2, 4, 16, 16), dtype=jnp.float32)

    loss = ssim_loss(pred, label, window_size=11, size_average=True)
    jax.block_until_ready(loss)
    print("KERNEL_OK")
</pallas_src>

<mosaic_0001>
module attributes {stable_mosaic.version = 11 : i64} {
  func.func @kernel(%arg0: i32, %arg1: memref<80x80xf32, #tpu.memory_space<vmem>>, %arg2: memref<128x128xf32, #tpu.memory_space<vmem>>, %arg3: memref<16x128xf32, #tpu.memory_space<vmem>>, %arg4: memref<16x128xf32, #tpu.memory_space<vmem>>, %arg5: memref<8x128xf32, #tpu.memory_space<vmem>>) attributes {dimension_semantics = [#tpu.dimension_semantics<parallel>], iteration_bounds = array<i64: 1>, scalar_prefetch = 0 : i64, scratch_operands = 0 : i64, tpu.core_type = #tpu.core_type<tc>, window_params = [{pipeline_mode = #tpu.pipeline_mode<synchronous>, transform_indices = @transform_0, window_bounds = array<i64: 80, 80>}, {pipeline_mode = #tpu.pipeline_mode<synchronous>, transform_indices = @transform_1, window_bounds = array<i64: 128, 128>}, {transform_indices = @transform_2, window_bounds = array<i64: 16, 128>}, {transform_indices = @transform_3, window_bounds = array<i64: 16, 128>}, {transform_indices = @transform_4, window_bounds = array<i64: 8, 128>}]} {
    %c0 = arith.constant 0 : index
    %c0_0 = arith.constant 0 : index
    %0 = vector.load %arg3[%c0, %c0_0] : memref<16x128xf32, #tpu.memory_space<vmem>>, vector<16x128xf32>
    %c0_1 = arith.constant 0 : index
    %c0_2 = arith.constant 0 : index
    %1 = vector.load %arg4[%c0_1, %c0_2] : memref<16x128xf32, #tpu.memory_space<vmem>>, vector<16x128xf32>
    %2 = arith.mulf %0, %0 : vector<16x128xf32>
    %3 = arith.mulf %1, %1 : vector<16x128xf32>
    %4 = arith.mulf %0, %1 : vector<16x128xf32>
    %5 = tpu.concatenate %0, %1, %2, %3, %4 in 0 : vector<16x128xf32>, vector<16x128xf32>, vector<16x128xf32>, vector<16x128xf32>, vector<16x128xf32> -> vector<80x128xf32>
    %c0_3 = arith.constant 0 : index
    %c0_4 = arith.constant 0 : index
    %6 = vector.load %arg2[%c0_3, %c0_4] : memref<128x128xf32, #tpu.memory_space<vmem>>, vector<128x128xf32>
    %cst = arith.constant dense<0.000000e+00> : vector<80x128xf32>
    %7 = tpu.matmul %5, %6, %cst {dimension_numbers = #tpu.dot_dimension_numbers<[1], [0], [0], [1], [0, 0, 1, 1], [], []>} : vector<80x128xf32>, vector<128x128xf32>, vector<80x128xf32> -> vector<80x128xf32>
    %c0_5 = arith.constant 0 : index
    %c0_6 = arith.constant 0 : index
    %8 = vector.load %arg1[%c0_5, %c0_6] : memref<80x80xf32, #tpu.memory_space<vmem>>, vector<80x80xf32>
    %cst_7 = arith.constant dense<0.000000e+00> : vector<80x128xf32>
    %9 = tpu.matmul %8, %7, %cst_7 {dimension_numbers = #tpu.dot_dimension_numbers<[1], [0], [0], [1], [0, 0, 1, 1], [], []>} : vector<80x80xf32>, vector<80x128xf32>, vector<80x128xf32> -> vector<80x128xf32>
    %10 = vector.extract_strided_slice %9 {offsets = [0, 0], sizes = [16, 128], strides = [1, 1]} : vector<80x128xf32> to vector<16x128xf32>
    %11 = vector.extract_strided_slice %9 {offsets = [16, 0], sizes = [16, 128], strides = [1, 1]} : vector<80x128xf32> to vector<16x128xf32>
    %12 = vector.extract_strided_slice %9 {offsets = [32, 0], sizes = [16, 128], strides = [1, 1]} : vector<80x128xf32> to vector<16x128xf32>
    %13 = vector.extract_strided_slice %9 {offsets = [48, 0], sizes = [16, 128], strides = [1, 1]} : vector<80x128xf32> to vector<16x128xf32>
    %14 = vector.extract_strided_slice %9 {offsets = [64, 0], sizes = [16, 128], strides = [1, 1]} : vector<80x128xf32> to vector<16x128xf32>
    %15 = arith.mulf %10, %10 : vector<16x128xf32>
    %16 = arith.mulf %11, %11 : vector<16x128xf32>
    %17 = arith.mulf %10, %11 : vector<16x128xf32>
    %18 = arith.subf %12, %15 : vector<16x128xf32>
    %19 = arith.subf %13, %16 : vector<16x128xf32>
    %20 = arith.subf %14, %17 : vector<16x128xf32>
    %cst_8 = arith.constant 2.000000e+00 : f32
    %21 = vector.broadcast %cst_8 : f32 to vector<16x128xf32>
    %22 = arith.mulf %21, %17 : vector<16x128xf32>
    %cst_9 = arith.constant 9.99999974E-5 : f32
    %23 = vector.broadcast %cst_9 : f32 to vector<16x128xf32>
    %24 = arith.addf %22, %23 : vector<16x128xf32>
    %cst_10 = arith.constant 2.000000e+00 : f32
    %25 = vector.broadcast %cst_10 : f32 to vector<16x128xf32>
    %26 = arith.mulf %25, %20 : vector<16x128xf32>
    %cst_11 = arith.constant 8.99999984E-4 : f32
    %27 = vector.broadcast %cst_11 : f32 to vector<16x128xf32>
    %28 = arith.addf %26, %27 : vector<16x128xf32>
    %29 = arith.mulf %24, %28 : vector<16x128xf32>
    %30 = arith.addf %15, %16 : vector<16x128xf32>
    %cst_12 = arith.constant 9.99999974E-5 : f32
    %31 = vector.broadcast %cst_12 : f32 to vector<16x128xf32>
    %32 = arith.addf %30, %31 : vector<16x128xf32>
    %33 = arith.addf %18, %19 : vector<16x128xf32>
    %cst_13 = arith.constant 8.99999984E-4 : f32
    %34 = vector.broadcast %cst_13 : f32 to vector<16x128xf32>
    %35 = arith.addf %33, %34 : vector<16x128xf32>
    %36 = arith.mulf %32, %35 : vector<16x128xf32>
    %37 = arith.divf %29, %36 : vector<16x128xf32>
    %cst_14 = arith.constant dense<0.000000e+00> : vector<128xf32>
    %38 = vector.multi_reduction <add>, %37, %cst_14 [0] : vector<16x128xf32> to vector<128xf32>
    %39 = vector.shape_cast %38 : vector<128xf32> to vector<1x128xf32>
    %40 = tpu.iota {dimensions = array<i32: 0>} : vector<8x128xi32>
    %c0_i32 = arith.constant 0 : i32
    %41 = vector.broadcast %c0_i32 : i32 to vector<8x128xi32>
    %42 = arith.cmpi eq, %40, %41 : vector<8x128xi32>
    %43 = vector.shape_cast %39 : vector<1x128xf32> to vector<1x128xf32>
    %44 = vector.broadcast %43 : vector<1x128xf32> to vector<8x128xf32>
    %cst_15 = arith.constant 0.000000e+00 : f32
    %45 = vector.broadcast %cst_15 : f32 to vector<8x128xf32>
    %46 = arith.select %42, %44, %45 : vector<8x128xi1>, vector<8x128xf32>
    %c0_16 = arith.constant 0 : index
    %c0_17 = arith.constant 0 : index
    %47 = vector.load %arg5[%c0_16, %c0_17] : memref<8x128xf32, #tpu.memory_space<vmem>>, vector<8x128xf32>
    tpu.vector_store %arg5[%c0_16, %c0_17], %46 {strides = array<i32>} : memref<8x128xf32, #tpu.memory_space<vmem>>, vector<8x128xf32>,
    return
  }
  func.func @transform_0(%arg0: i32) -> (i32, i32) {
    %c0_i32 = arith.constant 0 : i32
    %c0_i32_0 = arith.constant 0 : i32
    %c0_i32_1 = arith.constant 0 : i32
    return %c0_i32, %c0_i32_0 : i32, i32
  }
  func.func @transform_1(%arg0: i32) -> (i32, i32) {
    %c0_i32 = arith.constant 0 : i32
    %c0_i32_0 = arith.constant 0 : i32
    %c0_i32_1 = arith.constant 0 : i32
    return %c0_i32, %c0_i32_0 : i32, i32
  }
  func.func @transform_2(%arg0: i32) -> (i32, i32) {
    %c0_i32 = arith.constant 0 : i32
    %c0_i32_0 = arith.constant 0 : i32
    return %c0_i32, %arg0 : i32, i32
  }
  func.func @transform_3(%arg0: i32) -> (i32, i32) {
    %c0_i32 = arith.constant 0 : i32
    %c0_i32_0 = arith.constant 0 : i32
    return %c0_i32, %arg0 : i32, i32
  }
  func.func @transform_4(%arg0: i32) -> (i32, i32) {
    %c0_i32 = arith.constant 0 : i32
    %c0_i32_0 = arith.constant 0 : i32
    return %arg0, %c0_i32 : i32, i32
  }
}

</mosaic_0001>

<llo_original>
// kernel: tpu_custom_call.1
$region0: #{tpu_custom_call.1}
  #allocation0 [shape = 'u32[]', space=smem, size = 0x4, offset = 0x4, fixed_abs, tag = 'smem constant byte address 0x4 - core index']
  #allocation1 [shape = 'u32[144,128]{1,0:T(1,128)}', space=vmem, size = 0x12000, scoped, tag = 'internal scratch']
  %s0 = inlined_call_operand.hbm [shape: f32[80,80], index: 0, kind: input, shape index: {}]
  %s1 = inlined_call_operand.hbm [shape: f32[128,128], index: 1, kind: input, shape index: {}]
  %s2 = inlined_call_operand.hbm [shape: f32[16,128], index: 2, kind: input, shape index: {}]
  %s3 = inlined_call_operand.hbm [shape: f32[16,128], index: 3, kind: input, shape index: {}]
  %s4 = inlined_call_operand.hbm [shape: f32[8,128], index: 4, kind: output, shape index: {}]
  %s5 = sld [smem:[#allocation0]]
  $region42: #{tpu_custom_call.1} parent=0
    _
  %s7 = ssub.s32 1, %s5
  %s8 = scalar_select 0, %s7, %s5
  $region1: #{tpu_custom_call.1} parent=0
    #allocation2 [shape = 'u8[40960]{0}', space=vmem, size = 0xa000, scoped, tag = 'input window, operand 0, single buffered']
    #allocation3 [shape = 's32[1]{0}', space=sflag, size = 0x4, scoped, tag = 'scoped memory for tpu_custom_call.1']
    #allocation4 [shape = 's32[1]{0}', space=sflag, size = 0x4, scoped, tag = 'scoped memory for tpu_custom_call.1']
    #allocation5 [shape = 'u8[65536]{0}', space=vmem, size = 0x10000, scoped, tag = 'input window, operand 1, single buffered']
    #allocation6 [shape = 's32[1]{0}', space=sflag, size = 0x4, scoped, tag = 'scoped memory for tpu_custom_call.1']
    #allocation7 [shape = 'u8[8192]{0}', space=vmem, size = 0x2000, scoped, tag = 'input window, operand 2, single buffered']
    #allocation8 [shape = 'u8[8192]{0}', space=vmem, size = 0x2000, scoped, tag = 'input window, operand 3, single buffered']
    #allocation9 [shape = 's32[1]{0}', space=sflag, size = 0x4, scoped, tag = 'scoped memory for tpu_custom_call.1']
    #allocation10 [shape = 'u8[4096]{0}', space=vmem, size = 0x1000, scoped, tag = 'output window, operand 0, single buffered']
    %9 = vsyncpa [#allocation3], 0
    %10 = vsyncpa [#allocation6], 0
    %11 = vsyncpa [#allocation9], 0
    %12 = vsyncpa [#allocation4], 0
    // Predicated region
    $region2: #{tpu_custom_call.1} parent=1 // pred_check
      _
    $region3: #{tpu_custom_call.1} parent=1 // pred_check_branch
      %14 = sbr.rel (0) target = $region5
    $region4: #{tpu_custom_call.1} parent=1 // pred_region
      %s16 = ssub.s32 1280, 1280
      %17 = vsyncadd [#allocation3], %s16
      %s18 = sshll.u32 [#allocation2], 4
      %s19 = int_to_ptr.vmem [resolvable:$true] %s18
      %24 = dma.hbm_to_vmem [thread:$0]  %s0, 1280, %s19, [#allocation3], 128, 128, 8
    $region5: #{tpu_custom_call.1} parent=1 // pred_fallthru
      _
    // Predicated region
    $region6: #{tpu_custom_call.1} parent=1 // pred_check
      _
    $region7: #{tpu_custom_call.1} parent=1 // pred_check_branch
      %26 = sbr.rel (0) target = $region9
    $region8: #{tpu_custom_call.1} parent=1 // pred_region
      %s28 = ssub.s32 2048, 2048
      %29 = vsyncadd [#allocation6], %s28
      %s30 = sshll.u32 [#allocation5], 4
      %s31 = int_to_ptr.vmem [resolvable:$true] %s30
      %36 = dma.hbm_to_vmem [thread:$0]  %s1, 2048, %s31, [#allocation6], 128, 128, 8
    $region9: #{tpu_custom_call.1} parent=1 // pred_fallthru
      _
    // Predicated region
    $region10: #{tpu_custom_call.1} parent=1 // pred_check
      _
    $region11: #{tpu_custom_call.1} parent=1 // pred_check_branch
      %38 = sbr.rel (0) target = $region13
    $region12: #{tpu_custom_call.1} parent=1 // pred_region
      %s40 = ssub.s32 256, 256
      %41 = vsyncadd [#allocation6], %s40
      %s42 = sshll.u32 [#allocation7], 4
      %s43 = int_to_ptr.vmem [resolvable:$true] %s42
      %48 = dma.hbm_to_vmem [thread:$0]  %s2, 256, %s43, [#allocation6], 128, 128, 8
    $region13: #{tpu_custom_call.1} parent=1 // pred_fallthru
      _
    // Predicated region
    $region14: #{tpu_custom_call.1} parent=1 // pred_check
      _
    $region15: #{tpu_custom_call.1} parent=1 // pred_check_branch
      %50 = sbr.rel (0) target = $region17
    $region16: #{tpu_custom_call.1} parent=1 // pred_region
      %s52 = ssub.s32 256, 256
      %53 = vsyncadd [#allocation9], %s52
      %s54 = sshll.u32 [#allocation8], 4
      %s55 = int_to_ptr.vmem [resolvable:$true] %s54
      %60 = dma.hbm_to_vmem [thread:$0]  %s3, 256, %s55, [#allocation9], 128, 128, 8
    $region17: #{tpu_custom_call.1} parent=1 // pred_fallthru
      _
    // Predicated region
    $region18: #{tpu_custom_call.1} parent=1 // pred_check
      _
    $region19: #{tpu_custom_call.1} parent=1 // pred_check_branch
      %62 = sbr.rel (0) target = $region21
    $region20: #{tpu_custom_call.1} parent=1 // pred_region
      %63 = dma.done [#allocation3], 1280
    $region21: #{tpu_custom_call.1} parent=1 // pred_fallthru
      _
    // Predicated region
    $region22: #{tpu_custom_call.1} parent=1 // pred_check
      _
    $region23: #{tpu_custom_call.1} parent=1 // pred_check_branch
      %65 = sbr.rel (0) target = $region25
    $region24: #{tpu_custom_call.1} parent=1 // pred_region
      %66 = dma.done [#allocation6], 2048
    $region25: #{tpu_custom_call.1} parent=1 // pred_fallthru
      _
    // Predicated region
    $region26: #{tpu_custom_call.1} parent=1 // pred_check
      _
    $region27: #{tpu_custom_call.1} parent=1 // pred_check_branch
      %68 = sbr.rel (0) target = $region29
    $region28: #{tpu_custom_call.1} parent=1 // pred_region
      %69 = dma.done [#allocation6], 256
    $region29: #{tpu_custom_call.1} parent=1 // pred_fallthru
      _
    // Predicated region
    $region30: #{tpu_custom_call.1} parent=1 // pred_check
      _
    $region31: #{tpu_custom_call.1} parent=1 // pred_check_branch
      %71 = sbr.rel (0) target = $region33
    $region32: #{tpu_custom_call.1} parent=1 // pred_region
      %72 = dma.done [#allocation9], 256
    $region33: #{tpu_custom_call.1} parent=1 // pred_fallthru
      _
    %v73 = vld [vmem:[#allocation7] sm:$0xff]
    %v74 = vld [vmem:[#allocation7 + $0x8] sm:$0xff]
    %v75 = vld [vmem:[#allocation8] sm:$0xff]
    %v76 = vld [vmem:[#allocation8 + $0x8] sm:$0xff]
    %v77 = vmul.f32 %v73, %v73
    %v78 = vmul.f32 %v74, %v74
    %v79 = vmul.f32 %v75, %v75
    %v80 = vmul.f32 %v76, %v76
    %v81 = vmul.f32 %v73, %v75
    %v82 = vmul.f32 %v74, %v76
    %v83 = vld [vmem:[#allocation5] sm:$0xff]
    %v84 = vld [vmem:[#allocation5 + $0x8] sm:$0xff]
    %v85 = vld [vmem:[#allocation5 + $0x10] sm:$0xff]
    %v86 = vld [vmem:[#allocation5 + $0x18] sm:$0xff]
    %v87 = vld [vmem:[#allocation5 + $0x20] sm:$0xff]
    %v88 = vld [vmem:[#allocation5 + $0x28] sm:$0xff]
    %v89 = vld [vmem:[#allocation5 + $0x30] sm:$0xff]
    %v90 = vld [vmem:[#allocation5 + $0x38] sm:$0xff]
    %v91 = vld [vmem:[#allocation5 + $0x40] sm:$0xff]
    %v92 = vld [vmem:[#allocation5 + $0x48] sm:$0xff]
    %v93 = vld [vmem:[#allocation5 + $0x50] sm:$0xff]
    %v94 = vld [vmem:[#allocation5 + $0x58] sm:$0xff]
    %v95 = vld [vmem:[#allocation5 + $0x60] sm:$0xff]
    %v96 = vld [vmem:[#allocation5 + $0x68] sm:$0xff]
    %v97 = vld [vmem:[#allocation5 + $0x70] sm:$0xff]
    %v98 = vld [vmem:[#allocation5 + $0x78] sm:$0xff]
    %99 = vmatprep.subr.mxu0 0.0
    %100 = vmatpush1.msra.mxu0 %v83
    %101 = vmatprep.subr.mxu0 0.0
    %102 = vmatpush1.msra.mxu0 %v84
    %103 = vmatprep.subr.mxu0 0.0
    %104 = vmatpush1.msra.mxu0 %v85
    %105 = vmatprep.subr.mxu0 0.0
    %106 = vmatpush1.msra.mxu0 %v86
    %107 = vmatprep.subr.mxu0 0.0
    %108 = vmatpush1.msra.mxu0 %v87
    %109 = vmatprep.subr.mxu0 0.0
    %110 = vmatpush1.msra.mxu0 %v88
    %111 = vmatprep.subr.mxu0 0.0
    %112 = vmatpush1.msra.mxu0 %v89
    %113 = vmatprep.subr.mxu0 0.0
    %114 = vmatpush1.msra.mxu0 %v90
    %115 = vmatprep.subr.mxu0 0.0
    %116 = vmatpush1.msra.mxu0 %v91
    %117 = vmatprep.subr.mxu0 0.0
    %118 = vmatpush1.msra.mxu0 %v92
    %119 = vmatprep.subr.mxu0 0.0
    %120 = vmatpush1.msra.mxu0 %v93
    %121 = vmatprep.subr.mxu0 0.0
    %122 = vmatpush1.msra.mxu0 %v94
    %123 = vmatprep.subr.mxu0 0.0
    %124 = vmatpush1.msra.mxu0 %v95
    %125 = vmatprep.subr.mxu0 0.0
    %126 = vmatpush1.msra.mxu0 %v96
    %127 = vmatprep.subr.mxu0 0.0
    %128 = vmatpush1.msra.mxu0 %v97
    %129 = vmatprep.subr.mxu0 0.0
    %130 = vmatpush1.msra.mxu0 %v98
    %131 = vmatprep.subr.mxu0 0.0
    %132 = vmatpush1.msra.mxu0 0.0
    %133 = vmatprep.subr.mxu0 0.0
    %134 = vmatpush1.msra.mxu0 0.0
    %135 = vmatprep.subr.mxu0 0.0
    %136 = vmatpush1.msra.mxu0 0.0
    %137 = vmatprep.subr.mxu0 0.0
    %138 = vmatpush1.msra.mxu0 0.0
    %139 = vmatprep.subr.mxu0 0.0
    %140 = vmatpush1.msra.mxu0 0.0
    %141 = vmatprep.subr.mxu0 0.0
    %142 = vmatpush1.msra.mxu0 0.0
    %143 = vmatprep.subr.mxu0 0.0
    %144 = vmatpush1.msra.mxu0 0.0
    %145 = vmatprep.subr.mxu0 0.0
    %146 = vmatpush1.msra.mxu0 0.0
    %147 = vmatprep.subr.mxu0 0.0
    %148 = vmatpush1.msra.mxu0 0.0
    %149 = vmatprep.subr.mxu0 0.0
    %150 = vmatpush1.msra.mxu0 0.0
    %151 = vmatprep.subr.mxu0 0.0
    %152 = vmatpush1.msra.mxu0 0.0
    %153 = vmatprep.subr.mxu0 0.0
    %154 = vmatpush1.msra.mxu0 0.0
    %155 = vmatprep.subr.mxu0 0.0
    %156 = vmatpush1.msra.mxu0 0.0
    %157 = vmatprep.subr.mxu0 0.0
    %158 = vmatpush1.msra.mxu0 0.0
    %159 = vmatprep.subr.mxu0 0.0
    %160 = vmatpush1.msra.mxu0 0.0
    %161 = vmatprep.subr.mxu0 0.0
    %162 = vmatpush1.msra.mxu0 0.0
    %163 = vmatprep.mubr.f32.mxu0 0.0
    %164 = vmatmul.mubr.f32.gmra.mrb[0].mxu0 %v73
    %v165 = vpop.f32.mrb[0].mxu0
    %v166 = vadd.f32 0.0, %v165
    %v167 = vpop.f32.mrb[0].mxu0
    %168 = vmatprep.mubr.f32.mxu0 0.0
    %169 = vmatmul.mubr.f32.gmra.mrb[0].mxu0 %v74
    %v170 = vpop.f32.mrb[0].mxu0
    %v171 = vadd.f32 0.0, %v170
    %v172 = vpop.f32.mrb[0].mxu0
    %173 = vmatprep.mubr.f32.mxu0 0.0
    %174 = vmatmul.mubr.f32.gmra.mrb[0].mxu0 %v75
    %v175 = vpop.f32.mrb[0].mxu0
    %v176 = vadd.f32 0.0, %v175
    %v177 = vpop.f32.mrb[0].mxu0
    %178 = vmatprep.mubr.f32.mxu0 0.0
    %179 = vmatmul.mubr.f32.gmra.mrb[0].mxu0 %v76
    %v180 = vpop.f32.mrb[0].mxu0
    %v181 = vadd.f32 0.0, %v180
    %v182 = vpop.f32.mrb[0].mxu0
    %183 = vmatprep.mubr.f32.mxu0 0.0
    %184 = vmatmul.mubr.f32.gmra.mrb[0].mxu0 %v77
    %v185 = vpop.f32.mrb[0].mxu0
    %v186 = vadd.f32 0.0, %v185
    %v187 = vpop.f32.mrb[0].mxu0
    %188 = vmatprep.mubr.f32.mxu0 0.0
    %189 = vmatmul.mubr.f32.gmra.mrb[0].mxu0 %v78
    %v190 = vpop.f32.mrb[0].mxu0
    %v191 = vadd.f32 0.0, %v190
    %v192 = vpop.f32.mrb[0].mxu0
    %193 = vmatprep.mubr.f32.mxu0 0.0
    %194 = vmatmul.mubr.f32.gmra.mrb[0].mxu0 %v79
    %v195 = vpop.f32.mrb[0].mxu0
    %v196 = vadd.f32 0.0, %v195
    %v197 = vpop.f32.mrb[0].mxu0
    %198 = vmatprep.mubr.f32.mxu0 0.0
    %199 = vmatmul.mubr.f32.gmra.mrb[0].mxu0 %v80
    %v200 = vpop.f32.mrb[0].mxu0
    %v201 = vadd.f32 0.0, %v200
    %v202 = vpop.f32.mrb[0].mxu0
    %203 = vmatprep.mubr.f32.mxu0 0.0
    %204 = vmatmul.mubr.f32.gmra.mrb[0].mxu0 %v81
    %v205 = vpop.f32.mrb[0].mxu0
    %v206 = vadd.f32 0.0, %v205
    %v207 = vpop.f32.mrb[0].mxu0
    %208 = vmatprep.mubr.f32.mxu0 0.0
    %209 = vmatmul.mubr.f32.gmra.mrb[0].mxu0 %v82
    %v210 = vpop.f32.mrb[0].mxu0
    %v211 = vadd.f32 0.0, %v210
    %v212 = vpop.f32.mrb[0].mxu0
    %213 = vdwg.mxu0
    %v214 = vld [vmem:[#allocation2] sm:$0xff]
    %v215 = vld [vmem:[#allocation2 + $0x8] sm:$0xff]
    %v216 = vld [vmem:[#allocation2 + $0x10] sm:$0xff]
    %v217 = vld [vmem:[#allocation2 + $0x18] sm:$0xff]
    %v218 = vld [vmem:[#allocation2 + $0x20] sm:$0xff]
    %v219 = vld [vmem:[#allocation2 + $0x28] sm:$0xff]
    %v220 = vld [vmem:[#allocation2 + $0x30] sm:$0xff]
    %v221 = vld [vmem:[#allocation2 + $0x38] sm:$0xff]
    %v222 = vld [vmem:[#allocation2 + $0x40] sm:$0xff]
    %v223 = vld [vmem:[#allocation2 + $0x48] sm:$0xff]
    %vm224 = vcmask 654336
    %v226 = vsel %vm224, %v214, 0
    %v229 = vsel %vm224, %v215, 0
    %v232 = vsel %vm224, %v216, 0
    %v235 = vsel %vm224, %v217, 0
    %v238 = vsel %vm224, %v218, 0
    %v241 = vsel %vm224, %v219, 0
    %v244 = vsel %vm224, %v220, 0
    %v247 = vsel %vm224, %v221, 0
    %v250 = vsel %vm224, %v222, 0
    %v253 = vsel %vm224, %v223, 0
    %255 = vmatprep.subr.mxu0 0.0
    %256 = vmatpush1.msra.mxu0 %v166
    %257 = vmatprep.subr.mxu0 0.0
    %258 = vmatpush1.msra.mxu0 %v171
    %259 = vmatprep.subr.mxu0 0.0
    %260 = vmatpush1.msra.mxu0 %v176
    %261 = vmatprep.subr.mxu0 0.0
    %262 = vmatpush1.msra.mxu0 %v181
    %263 = vmatprep.subr.mxu0 0.0
    %264 = vmatpush1.msra.mxu0 %v186
    %265 = vmatprep.subr.mxu0 0.0
    %266 = vmatpush1.msra.mxu0 %v191
    %267 = vmatprep.subr.mxu0 0.0
    %268 = vmatpush1.msra.mxu0 %v196
    %269 = vmatprep.subr.mxu0 0.0
    %270 = vmatpush1.msra.mxu0 %v201
    %271 = vmatprep.subr.mxu0 0.0
    %272 = vmatpush1.msra.mxu0 %v206
    %273 = vmatprep.subr.mxu0 0.0
    %274 = vmatpush1.msra.mxu0 %v211
    %275 = vmatprep.subr.mxu0 0.0
    %276 = vmatpush1.msra.mxu0 0.0
    %277 = vmatprep.subr.mxu0 0.0
    %278 = vmatpush1.msra.mxu0 0.0
    %279 = vmatprep.subr.mxu0 0.0
    %280 = vmatpush1.msra.mxu0 0.0
    %281 = vmatprep.subr.mxu0 0.0
    %282 = vmatpush1.msra.mxu0 0.0
    %283 = vmatprep.subr.mxu0 0.0
    %284 = vmatpush1.msra.mxu0 0.0
    %285 = vmatprep.subr.mxu0 0.0
    %286 = vmatpush1.msra.mxu0 0.0
    %287 = vmatprep.subr.mxu0 0.0
    %288 = vmatpush1.msra.mxu0 0.0
    %289 = vmatprep.subr.mxu0 0.0
    %290 = vmatpush1.msra.mxu0 0.0
    %291 = vmatprep.subr.mxu0 0.0
    %292 = vmatpush1.msra.mxu0 0.0
    %293 = vmatprep.subr.mxu0 0.0
    %294 = vmatpush1.msra.mxu0 0.0
    %295 = vmatprep.subr.mxu0 0.0
    %296 = vmatpush1.msra.mxu0 0.0
    %297 = vmatprep.subr.mxu0 0.0
    %298 = vmatpush1.msra.mxu0 0.0
    %299 = vmatprep.subr.mxu0 0.0
    %300 = vmatpush1.msra.mxu0 0.0
    %301 = vmatprep.subr.mxu0 0.0
    %302 = vmatpush1.msra.mxu0 0.0
    %303 = vmatprep.subr.mxu0 0.0
    %304 = vmatpush1.msra.mxu0 0.0
    %305 = vmatprep.subr.mxu0 0.0
    %306 = vmatpush1.msra.mxu0 0.0
    %307 = vmatprep.subr.mxu0 0.0
    %308 = vmatpush1.msra.mxu0 0.0
    %309 = vmatprep.subr.mxu0 0.0
    %310 = vmatpush1.msra.mxu0 0.0
    %311 = vmatprep.subr.mxu0 0.0
    %312 = vmatpush1.msra.mxu0 0.0
    %313 = vmatprep.subr.mxu0 0.0
    %314 = vmatpush1.msra.mxu0 0.0
    %315 = vmatprep.subr.mxu0 0.0
    %316 = vmatpush1.msra.mxu0 0.0
    %317 = vmatprep.subr.mxu0 0.0
    %318 = vmatpush1.msra.mxu0 0.0
    %319 = vmatprep.mubr.f32.mxu0 0.0
    %320 = vmatmul.mubr.f32.gmra.mrb[0].mxu0 %v226
    %v321 = vpop.f32.mrb[0].mxu0
    %v322 = vadd.f32 0.0, %v321
    %v323 = vpop.f32.mrb[0].mxu0
    %324 = vmatprep.mubr.f32.mxu0 0.0
    %325 = vmatmul.mubr.f32.gmra.mrb[0].mxu0 %v229
    %v326 = vpop.f32.mrb[0].mxu0
    %v327 = vadd.f32 0.0, %v326
    %v328 = vpop.f32.mrb[0].mxu0
    %329 = vmatprep.mubr.f32.mxu0 0.0
    %330 = vmatmul.mubr.f32.gmra.mrb[0].mxu0 %v232
    %v331 = vpop.f32.mrb[0].mxu0
    %v332 = vadd.f32 0.0, %v331
    %v333 = vpop.f32.mrb[0].mxu0
    %334 = vmatprep.mubr.f32.mxu0 0.0
    %335 = vmatmul.mubr.f32.gmra.mrb[0].mxu0 %v235
    %v336 = vpop.f32.mrb[0].mxu0
    %v337 = vadd.f32 0.0, %v336
    %v338 = vpop.f32.mrb[0].mxu0
    %339 = vmatprep.mubr.f32.mxu0 0.0
    %340 = vmatmul.mubr.f32.gmra.mrb[0].mxu0 %v238
    %v341 = vpop.f32.mrb[0].mxu0
    %v342 = vadd.f32 0.0, %v341
    %v343 = vpop.f32.mrb[0].mxu0
    %344 = vmatprep.mubr.f32.mxu0 0.0
    %345 = vmatmul.mubr.f32.gmra.mrb[0].mxu0 %v241
    %v346 = vpop.f32.mrb[0].mxu0
    %v347 = vadd.f32 0.0, %v346
    %v348 = vpop.f32.mrb[0].mxu0
    %349 = vmatprep.mubr.f32.mxu0 0.0
    %350 = vmatmul.mubr.f32.gmra.mrb[0].mxu0 %v244
    %v351 = vpop.f32.mrb[0].mxu0
    %v352 = vadd.f32 0.0, %v351
    %v353 = vpop.f32.mrb[0].mxu0
    %354 = vmatprep.mubr.f32.mxu0 0.0
    %355 = vmatmul.mubr.f32.gmra.mrb[0].mxu0 %v247
    %v356 = vpop.f32.mrb[0].mxu0
    %v357 = vadd.f32 0.0, %v356
    %v358 = vpop.f32.mrb[0].mxu0
    %359 = vmatprep.mubr.f32.mxu0 0.0
    %360 = vmatmul.mubr.f32.gmra.mrb[0].mxu0 %v250
    %v361 = vpop.f32.mrb[0].mxu0
    %v362 = vadd.f32 0.0, %v361
    %v363 = vpop.f32.mrb[0].mxu0
    %364 = vmatprep.mubr.f32.mxu0 0.0
    %365 = vmatmul.mubr.f32.gmra.mrb[0].mxu0 %v253
    %v366 = vpop.f32.mrb[0].mxu0
    %v367 = vadd.f32 0.0, %v366
    %v368 = vpop.f32.mrb[0].mxu0
    %369 = vdwg.mxu0
    %v370 = vmul.f32 %v322, %v322
    %v371 = vmul.f32 %v327, %v327
    %v372 = vmul.f32 %v332, %v332
    %v373 = vmul.f32 %v337, %v337
    %v374 = vmul.f32 %v322, %v332
    %v375 = vmul.f32 %v327, %v337
    %v376 = vsub.f32 %v342, %v370
    %v377 = vsub.f32 %v347, %v371
    %v378 = vsub.f32 %v352, %v372
    %v379 = vsub.f32 %v357, %v373
    %v380 = vsub.f32 %v362, %v374
    %v381 = vsub.f32 %v367, %v375
    %v382 = vmul.f32 %v374, 2.0
    %v383 = vmul.f32 %v375, 2.0
    %v384 = vadd.f32 %v382, 0.0001
    %v385 = vadd.f32 %v383, 0.0001
    %v386 = vmul.f32 %v380, 2.0
    %v387 = vmul.f32 %v381, 2.0
    %v388 = vadd.f32 %v386, 0.0009
    %v389 = vadd.f32 %v387, 0.0009
    %v390 = vmul.f32 %v384, %v388
    %v391 = vmul.f32 %v385, %v389
    %v392 = vadd.f32 %v370, %v372
    %v393 = vadd.f32 %v371, %v373
    %v394 = vadd.f32 %v392, 0.0001
    %v395 = vadd.f32 %v393, 0.0001
    %v396 = vadd.f32 %v376, %v378
    %v397 = vadd.f32 %v377, %v379
    %v398 = vadd.f32 %v396, 0.0009
    %v399 = vadd.f32 %v397, 0.0009
    %v400 = vmul.f32 %v394, %v398
    %v401 = vmul.f32 %v395, %v399
    %v402 = vrcp.pop %v400
    %v403 = vmul.f32 %v390, %v402
    %v404 = vrcp.pop %v401
    %v405 = vmul.f32 %v391, %v404
    %v406 = vadd.f32 %v403, %v405
    %v407 = vrot.slane %v406, 4
    %v408 = vadd.f32 %v406, %v407
    %v409 = vrot.slane %v408, 2
    %v410 = vadd.f32 %v408, %v409
    %v411 = vrot.slane %v410, 1
    %v412 = vadd.f32 %v410, %v411
    %v413 = vlaneseq
    %v414 = vshrl.u32 %v413, 7
    %vm415 = vcmp.eq.s32.totalorder %v414, 0
    %v416 = vsel %vm415, %v412, 0.0
    %417 = vst [vmem:[#allocation10] sm:$0xff] %v416
    // Predicated region
    $region34: #{tpu_custom_call.1} parent=1 // pred_check
      _
    $region35: #{tpu_custom_call.1} parent=1 // pred_check_branch
      %419 = sbr.rel (0) target = $region37
    $region36: #{tpu_custom_call.1} parent=1 // pred_region
      %s421 = ssub.s32 128, 128
      %422 = vsyncadd [#allocation4], %s421
      %s424 = sshll.u32 [#allocation10], 4
      %s425 = int_to_ptr.vmem [resolvable:$true] %s424
      %427 = dma.vmem_to_hbm [thread:$0]  %s425, 128, %s4, [#allocation4]
    $region37: #{tpu_custom_call.1} parent=1 // pred_fallthru
      _
    // Predicated region
    $region38: #{tpu_custom_call.1} parent=1 // pred_check
      _
    $region39: #{tpu_custom_call.1} parent=1 // pred_check_branch
      %429 = sbr.rel (0) target = $region41
    $region40: #{tpu_custom_call.1} parent=1 // pred_region
      %430 = dma.done [#allocation4], 128
    $region41: #{tpu_custom_call.1} parent=1 // pred_fallthru
      _
    %431 = vsyncpa [#allocation3], 1
    %432 = vsyncpa [#allocation6], 1
    %433 = vsyncpa [#allocation9], 1
    %434 = vsyncpa [#allocation4], 1

</llo_original>
